<compile_context>
chip_gen: v6e
topology: v6e:2x2x1
jax: 0.10.0
libtpu: 0.0.40
codegen_flags: <defaults>
</compile_context>

<pallas_src>
import functools

import jax
import jax.numpy as jnp
from jax.experimental import pallas as pl
from jax.experimental.pallas import tpu as pltpu

_LANES = 128
_MAX_ROW_TILE = 4096                 # (4096, 128) f32 = 2 MiB per input tile
_VMEM_LIMIT_BYTES = 32 * 1024 * 1024  # >= default scoped limit on all gens


def _bce_masked_kernel(x_ref, t_ref, sum_ref, cnt_ref, *,
                       valid_rows, row_tile, mask_rows):
    x = x_ref[...].astype(jnp.float32)
    t = t_ref[...].astype(jnp.float32)

    # Numerically-stable BCE-with-logits (same formula as PyTorch; also valid
    # for soft labels 0 < t < 1):
    #   loss = max(x, 0) - x*t + log(1 + exp(-|x|))
    loss = jnp.maximum(x, 0.0) - x * t + jnp.log1p(jnp.exp(-jnp.abs(x)))

    mask = t > 0.0
    if mask_rows:
        # Ragged last tile / oversized block: rows past the true row count may
        # contain unspecified data -> exclude them explicitly.
        row_ids = jax.lax.broadcasted_iota(jnp.int32, x.shape, 0)
        row_ids = row_ids + pl.program_id(0) * row_tile
        mask = jnp.logical_and(mask, row_ids < valid_rows)

    # Per-lane partials (reduce over the rows axis only, VPU-friendly).  The
    # tiny cross-lane / cross-tile reduce happens outside the kernel.
    psum = jnp.sum(jnp.where(mask, loss, 0.0), axis=0)          # (128,)
    pcnt = jnp.sum(mask.astype(jnp.float32), axis=0)            # (128,)
    sum_ref[...] = psum.reshape(1, 1, _LANES)
    cnt_ref[...] = pcnt.reshape(1, 1, _LANES)


@jax.jit
def bce_masked(inputs, targets):
    assert inputs.shape == targets.shape

    # Keep native dtypes; all math is done in f32 inside the kernel.
    x = inputs.reshape(-1)
    t = targets.reshape(-1)
    n = x.shape[0]

    if n == 0:
        # torch: mean over an empty selection is NaN.
        return jnp.float32(jnp.nan)

    # Only pad when the flat size is not lane-aligned (avoids a full extra
    # HBM copy in the common case).  Padded targets are 0 -> masked out.
    if n % _LANES:
        pad = _LANES - n % _LANES
        x = jnp.pad(x, (0, pad))
        t = jnp.pad(t, (0, pad))

    rows = x.shape[0] // _LANES
    x2 = x.reshape(rows, _LANES)
    t2 = t.reshape(rows, _LANES)

    # Row-tile alignment: 8 sublanes for 4-byte dtypes, 16 for bf16, 32 for
    # int8/bool (packed sublanes).
    min_itemsize = min(x2.dtype.itemsize, t2.dtype.itemsize)
    row_align = max(8, 32 // min_itemsize)
    row_tile = min(_MAX_ROW_TILE, pl.cdiv(rows, row_align) * row_align)
    num_tiles = pl.cdiv(rows, row_tile)
    mask_rows = (rows % row_tile) != 0

    kernel = functools.partial(
        _bce_masked_kernel,
        valid_rows=rows, row_tile=row_tile, mask_rows=mask_rows)

    sum_part, cnt_part = pl.pallas_call(
        kernel,
        out_shape=(
            jax.ShapeDtypeStruct((num_tiles, 1, _LANES), jnp.float32),
            jax.ShapeDtypeStruct((num_tiles, 1, _LANES), jnp.float32),
        ),
        grid=(num_tiles,),
        in_specs=[
            pl.BlockSpec((row_tile, _LANES), lambda i: (i, 0)),
            pl.BlockSpec((row_tile, _LANES), lambda i: (i, 0)),
        ],
        out_specs=(
            pl.BlockSpec((1, 1, _LANES), lambda i: (i, 0, 0)),
            pl.BlockSpec((1, 1, _LANES), lambda i: (i, 0, 0)),
        ),
        compiler_params=pltpu.CompilerParams(
            # No cross-step carry -> fully parallel; megacore (v7x) shards
            # this axis across both TensorCores automatically.
            dimension_semantics=("parallel",),
            vmem_limit_bytes=_VMEM_LIMIT_BYTES,
        ),
    )(x2, t2)

    loss_sum = jnp.sum(sum_part)
    count = jnp.sum(cnt_part)
    # count == 0 -> NaN, matching torch's mean() over an empty tensor.
    return loss_sum / count


def _reference(inputs, targets):
    x = inputs.astype(jnp.float32)
    t = targets.astype(jnp.float32)
    loss = jnp.maximum(x, 0.0) - x * t + jnp.log1p(jnp.exp(-jnp.abs(x)))
    mask = (t > 0.0).astype(jnp.float32)
    return jnp.sum(loss * mask) / jnp.sum(mask)


if __name__ == "__main__":
    key = jax.random.PRNGKey(0)
    k1, k2 = jax.random.split(key)

    # Small shape consistent with a segmentation-style loss: (B, C, H, W)
    shape = (2, 4, 16, 16)
    inputs = jax.random.normal(k1, shape, dtype=jnp.float32)
    # Binary targets in {0, 1}, ~50% positive.
    targets = (jax.random.uniform(k2, shape) > 0.5).astype(jnp.float32)

    out = bce_masked(inputs, targets)
    jax.block_until_ready(out)

    ref = _reference(inputs, targets)
    assert jnp.allclose(out, ref, rtol=1e-5, atol=1e-6), (out, ref)

    print("KERNEL_OK")
</pallas_src>

<mosaic_0001>
module attributes {stable_mosaic.version = 11 : i64} {
  func.func @_bce_masked_kernel(%arg0: i32, %arg1: memref<16x128xf32, #tpu.memory_space<vmem>>, %arg2: memref<16x128xf32, #tpu.memory_space<vmem>>, %arg3: memref<1x1x128xf32, #tpu.memory_space<vmem>>, %arg4: memref<1x1x128xf32, #tpu.memory_space<vmem>>) attributes {dimension_semantics = [#tpu.dimension_semantics<parallel>], iteration_bounds = array<i64: 1>, scalar_prefetch = 0 : i64, scratch_operands = 0 : i64, tpu.core_type = #tpu.core_type<tc>, window_params = [{transform_indices = @transform_0, window_bounds = array<i64: 16, 128>}, {transform_indices = @transform_1, window_bounds = array<i64: 16, 128>}, {transform_indices = @transform_2, window_bounds = array<i64: 1, 1, 128>}, {transform_indices = @transform_3, window_bounds = array<i64: 1, 1, 128>}]} {
    %c0 = arith.constant 0 : index
    %c0_0 = arith.constant 0 : index
    %0 = vector.load %arg1[%c0, %c0_0] : memref<16x128xf32, #tpu.memory_space<vmem>>, vector<16x128xf32>
    %c0_1 = arith.constant 0 : index
    %c0_2 = arith.constant 0 : index
    %1 = vector.load %arg2[%c0_1, %c0_2] : memref<16x128xf32, #tpu.memory_space<vmem>>, vector<16x128xf32>
    %cst = arith.constant 0.000000e+00 : f32
    %2 = vector.broadcast %cst : f32 to vector<16x128xf32>
    %3 = arith.maximumf %0, %2 : vector<16x128xf32>
    %4 = arith.mulf %0, %1 : vector<16x128xf32>
    %5 = arith.subf %3, %4 : vector<16x128xf32>
    %6 = math.absf %0 : vector<16x128xf32>
    %cst_3 = arith.constant 0.000000e+00 : f32
    %7 = vector.broadcast %cst_3 : f32 to vector<16x128xf32>
    %8 = arith.subf %7, %6 : vector<16x128xf32>
    %9 = math.exp %8 : vector<16x128xf32>
    %10 = math.log1p %9 : vector<16x128xf32>
    %11 = arith.addf %5, %10 : vector<16x128xf32>
    %cst_4 = arith.constant 0.000000e+00 : f32
    %12 = vector.broadcast %cst_4 : f32 to vector<16x128xf32>
    %13 = arith.cmpf ogt, %1, %12 : vector<16x128xf32>
    %cst_5 = arith.constant 0.000000e+00 : f32
    %14 = vector.broadcast %cst_5 : f32 to vector<16x128xf32>
    %15 = arith.select %13, %11, %14 : vector<16x128xi1>, vector<16x128xf32>
    %cst_6 = arith.constant dense<0.000000e+00> : vector<128xf32>
    %16 = vector.multi_reduction <add>, %15, %cst_6 [0] : vector<16x128xf32> to vector<128xf32>
    %17 = arith.extui %13 : vector<16x128xi1> to vector<16x128xi32>
    %18 = arith.sitofp %17 : vector<16x128xi32> to vector<16x128xf32>
    %cst_7 = arith.constant dense<0.000000e+00> : vector<128xf32>
    %19 = vector.multi_reduction <add>, %18, %cst_7 [0] : vector<16x128xf32> to vector<128xf32>
    %20 = vector.shape_cast %16 : vector<128xf32> to vector<1x1x128xf32>
    %c0_8 = arith.constant 0 : index
    %c0_9 = arith.constant 0 : index
    %c0_10 = arith.constant 0 : index
    %21 = vector.load %arg3[%c0_8, %c0_9, %c0_10] : memref<1x1x128xf32, #tpu.memory_space<vmem>>, vector<1x1x128xf32>
    tpu.vector_store %arg3[%c0_8, %c0_9, %c0_10], %20 {strides = array<i32>} : memref<1x1x128xf32, #tpu.memory_space<vmem>>, vector<1x1x128xf32>,
    %22 = vector.shape_cast %19 : vector<128xf32> to vector<1x1x128xf32>
    %c0_11 = arith.constant 0 : index
    %c0_12 = arith.constant 0 : index
    %c0_13 = arith.constant 0 : index
    %23 = vector.load %arg4[%c0_11, %c0_12, %c0_13] : memref<1x1x128xf32, #tpu.memory_space<vmem>>, vector<1x1x128xf32>
    tpu.vector_store %arg4[%c0_11, %c0_12, %c0_13], %22 {strides = array<i32>} : memref<1x1x128xf32, #tpu.memory_space<vmem>>, vector<1x1x128xf32>,
    return
  }
  func.func @transform_0(%arg0: i32) -> (i32, i32) {
    %c0_i32 = arith.constant 0 : i32
    %c0_i32_0 = arith.constant 0 : i32
    return %arg0, %c0_i32 : i32, i32
  }
  func.func @transform_1(%arg0: i32) -> (i32, i32) {
    %c0_i32 = arith.constant 0 : i32
    %c0_i32_0 = arith.constant 0 : i32
    return %arg0, %c0_i32 : i32, i32
  }
  func.func @transform_2(%arg0: i32) -> (i32, i32, i32) {
    %c0_i32 = arith.constant 0 : i32
    %c0_i32_0 = arith.constant 0 : i32
    %c0_i32_1 = arith.constant 0 : i32
    return %arg0, %c0_i32, %c0_i32_0 : i32, i32, i32
  }
  func.func @transform_3(%arg0: i32) -> (i32, i32, i32) {
    %c0_i32 = arith.constant 0 : i32
    %c0_i32_0 = arith.constant 0 : i32
    %c0_i32_1 = arith.constant 0 : i32
    return %arg0, %c0_i32, %c0_i32_0 : i32, i32, i32
  }
}

</mosaic_0001>

<llo_original>
// kernel: bce_masked.1
$region0: #{bce_masked.1}
  #allocation0 [shape = 'u32[]', space=smem, size = 0x4, offset = 0x4, fixed_abs, tag = 'smem constant byte address 0x4 - core index']
  #allocation1 [shape = 'u32[144,128]{1,0:T(1,128)}', space=vmem, size = 0x12000, scoped, tag = 'internal scratch']
  %s0 = inlined_call_operand.vmem [shape: f32[16,128], index: 0, kind: input, shape index: {}]
  %s1 = inlined_call_operand.vmem [shape: f32[16,128], index: 1, kind: input, shape index: {}]
  %s2 = inlined_call_operand.vmem [shape: f32[1,1,128], index: 2, kind: output, shape index: {0}]
  %s3 = inlined_call_operand.vmem [shape: f32[1,1,128], index: 3, kind: output, shape index: {1}]
  %4 = xla_tuple %s2, %s3
  %s5 = sld [smem:[#allocation0]]
  $region26: #{bce_masked.1} parent=0
    _
  %s7 = ssub.s32 1, %s5
  %s8 = scalar_select 0, %s7, %s5
  // Predicated region
  $region2: #{bce_masked.1} parent=0 // pred_check
    _
  $region3: #{bce_masked.1} parent=0 // pred_check_branch
    %10 = sbr.rel (0) target = $region5
  $region4: #{bce_masked.1} parent=0 // pred_region
    _
  $region5: #{bce_masked.1} parent=0 // pred_fallthru
    _
  // Predicated region
  $region6: #{bce_masked.1} parent=0 // pred_check
    _
  $region7: #{bce_masked.1} parent=0 // pred_check_branch
    %12 = sbr.rel (0) target = $region9
  $region8: #{bce_masked.1} parent=0 // pred_region
    _
  $region9: #{bce_masked.1} parent=0 // pred_fallthru
    _
  %v13 = vld [vmem:[%s0] sm:$0xff]
  %v14 = vld [vmem:[%s0 + $0x8] sm:$0xff]
  %v15 = vld [vmem:[%s1] sm:$0xff]
  %v16 = vld [vmem:[%s1 + $0x8] sm:$0xff]
  %v17 = vmax.f32 %v13, 0.0
  %v18 = vmax.f32 %v14, 0.0
  %v19 = vmul.f32 %v13, %v15
  %v20 = vmul.f32 %v14, %v16
  %v21 = vsub.f32 %v17, %v19
  %v22 = vsub.f32 %v18, %v20
  %v23 = vand.u32 2147483647, %v13
  %v24 = vand.u32 2147483647, %v14
  %v25 = vsub.f32 0.0, %v23
  %v26 = vsub.f32 0.0, %v24
  %v27 = vmul.f32 %v25, 1.442695
  %v28 = vpow.pop %v27
  %v29 = vmul.f32 %v26, 1.442695
  %v30 = vpow.pop %v29
  %v31 = vadd.f32 %v28, 1.0
  %v32 = vlog2.pop %v31
  %v33 = vmul.f32 %v32, 0.6931472
  %v34 = vmul.f32 -0.5, %v28
  %v35 = vadd.f32 %v34, 1.0
  %v36 = vmul.f32 %v35, %v28
  %v37 = vand.u32 2147483647, %v28
  %vm38 = vcmp.lt.f32.partialorder %v37, 0.0004427343
  %v39 = vsel %vm38, %v36, %v33
  %v40 = vadd.f32 %v30, 1.0
  %v41 = vlog2.pop %v40
  %v42 = vmul.f32 %v41, 0.6931472
  %v43 = vmul.f32 -0.5, %v30
  %v44 = vadd.f32 %v43, 1.0
  %v45 = vmul.f32 %v44, %v30
  %v46 = vand.u32 2147483647, %v30
  %vm47 = vcmp.lt.f32.partialorder %v46, 0.0004427343
  %v48 = vsel %vm47, %v45, %v42
  %v49 = vadd.f32 %v21, %v39
  %v50 = vadd.f32 %v22, %v48
  %vm51 = vcmp.gt.f32.partialorder %v15, 0.0
  %vm52 = vcmp.gt.f32.partialorder %v16, 0.0
  %v53 = vsel %vm51, %v49, 0.0
  %v54 = vsel %vm52, %v50, 0.0
  %v55 = vadd.f32 %v53, %v54
  %v56 = vrot.slane %v55, 4
  %v57 = vadd.f32 %v55, %v56
  %v58 = vrot.slane %v57, 2
  %v59 = vadd.f32 %v57, %v58
  %v60 = vrot.slane %v59, 1
  %v61 = vadd.f32 %v59, %v60
  %v62 = vsel %vm51, 1, 0
  %v63 = vsel %vm52, 1, 0
  %v64 = vcvt.s32.f32 %v62
  %v65 = vcvt.s32.f32 %v63
  %v66 = vadd.f32 %v64, %v65
  %v67 = vrot.slane %v66, 4
  %v68 = vadd.f32 %v66, %v67
  %v69 = vrot.slane %v68, 2
  %v70 = vadd.f32 %v68, %v69
  %v71 = vrot.slane %v70, 1
  %v72 = vadd.f32 %v70, %v71
  %73 = vst [vmem:[%s2] sm:$0x1] %v61
  %74 = vst [vmem:[%s3] sm:$0x1] %v72
  // Predicated region
  $region10: #{bce_masked.1} parent=0 // pred_check
    _
  $region11: #{bce_masked.1} parent=0 // pred_check_branch
    %76 = sbr.rel (0) target = $region13
  $region12: #{bce_masked.1} parent=0 // pred_region
    _
  $region13: #{bce_masked.1} parent=0 // pred_fallthru
    _
  // Predicated region
  $region14: #{bce_masked.1} parent=0 // pred_check
    _
  $region15: #{bce_masked.1} parent=0 // pred_check_branch
    %78 = sbr.rel (0) target = $region17
  $region16: #{bce_masked.1} parent=0 // pred_region
    _
  $region17: #{bce_masked.1} parent=0 // pred_fallthru
    _
  // Predicated region
  $region18: #{bce_masked.1} parent=0 // pred_check
    _
  $region19: #{bce_masked.1} parent=0 // pred_check_branch
    %80 = sbr.rel (0) target = $region21
  $region20: #{bce_masked.1} parent=0 // pred_region
    _
  $region21: #{bce_masked.1} parent=0 // pred_fallthru
    _
  // Predicated region
  $region22: #{bce_masked.1} parent=0 // pred_check
    _
  $region23: #{bce_masked.1} parent=0 // pred_check_branch
    %82 = sbr.rel (0) target = $region25
  $region24: #{bce_masked.1} parent=0 // pred_region
    _
  $region25: #{bce_masked.1} parent=0 // pred_fallthru
    _

</llo_original>
